<compile_context>
chip_gen: v5e
topology: v5e:2x2
jax: 0.10.0
libtpu: 0.0.40
codegen_flags: <defaults>
</compile_context>

<pallas_src>
import functools

import jax
import jax.numpy as jnp
from jax.experimental import pallas as pl
from jax.experimental.pallas import tpu as pltpu

_LANE = 128
_SUBLANE = 8
_MAX_BLOCK_ROWS = 256  # (256, 128) f32 block = 128 KiB per operand per buffer


# ---------------------------------------------------------------------------
# Kernels
# ---------------------------------------------------------------------------
def _pair_diffs(xa_ref, xb_ref, ta_ref, tb_ref):
    d = xa_ref[...].astype(jnp.float32) - xb_ref[...].astype(jnp.float32)
    td = ta_ref[...].astype(jnp.float32) - tb_ref[...].astype(jnp.float32)
    # one = +1 if td > 0 else -1  (same as 2*sign(clamp(td,min=0)) - 1)
    one = jnp.where(td > 0.0, jnp.float32(1.0), jnp.float32(-1.0))
    return d, one


def _ranker_mean_kernel(xa_ref, xb_ref, ta_ref, tb_ref, out_ref, *,
                        h, block_rows):
    g = pl.program_id(0)

    @pl.when(g == 0)
    def _():
        out_ref[...] = jnp.zeros_like(out_ref)

    d, one = _pair_diffs(xa_ref, xb_ref, ta_ref, tb_ref)
    # one*log(sigmoid(d)) + (1-one)*log(1-sigmoid(d)) == one*d - softplus(d)
    softplus = jnp.maximum(d, 0.0) + jnp.log(1.0 + jnp.exp(-jnp.abs(d)))
    terms = one * d - softplus

    # mask out zero-padded tail elements
    row = jax.lax.broadcasted_iota(jnp.int32, d.shape, 0)
    lane = jax.lax.broadcasted_iota(jnp.int32, d.shape, 1)
    idx = (g * block_rows + row) * _LANE + lane
    terms = jnp.where(idx < h, terms, 0.0)

    out_ref[...] += jnp.sum(terms)

    @pl.when(g == pl.num_programs(0) - 1)
    def _():
        out_ref[...] = out_ref[...] * jnp.float32(-1.0 / h)


def _ranker_none_kernel(xa_ref, xb_ref, ta_ref, tb_ref, out_ref, *, margin):
    d, one = _pair_diffs(xa_ref, xb_ref, ta_ref, tb_ref)
    s = jax.nn.sigmoid(d)
    out_ref[...] = jnp.maximum(jnp.float32(margin) - one * s, 0.0)


# ---------------------------------------------------------------------------
# Wrapper (glue: trim, pair split + flip, pad to lane-dense layout)
# ---------------------------------------------------------------------------
def _pad_and_tile(x, hp):
    pad = hp - x.shape[0]
    if pad:
        x = jnp.pad(x, (0, pad))
    return x.reshape(hp // _LANE, _LANE)


def ranker_loss(inputs, targets, *, margin=1.0, reduction="mean"):
    n = inputs.shape[0]
    # torch: if len(input) % 2 != 0 and len(input) > 2: drop last element
    if n % 2 != 0 and n > 2:
        inputs = inputs[:-1]
        targets = targets[:-1]
        n -= 1
    assert n % 2 == 0, "the batch size is not even."
    h = n // 2

    # pair i: first-half[i] vs flipped-second-half[i]  (== inputs[n-1-i])
    xa = inputs[:h]
    xb = jnp.flip(inputs[h:], 0)
    ta = targets[:h]
    tb = jnp.flip(targets[h:], 0)

    # lane/sublane-dense padded layout: (rows, 128), rows % 8 == 0
    rows = -(-h // _LANE)
    rows = -(-rows // _SUBLANE) * _SUBLANE
    if rows <= _MAX_BLOCK_ROWS:
        block_rows = rows
    else:
        block_rows = _MAX_BLOCK_ROWS
        rows = -(-rows // block_rows) * block_rows
    hp = rows * _LANE
    grid = (rows // block_rows,)

    xa, xb, ta, tb = (_pad_and_tile(v, hp) for v in (xa, xb, ta, tb))

    in_spec = pl.BlockSpec((block_rows, _LANE), lambda g: (g, 0),
                           memory_space=pltpu.VMEM)

    if reduction == "mean":
        out = pl.pallas_call(
            functools.partial(_ranker_mean_kernel, h=h, block_rows=block_rows),
            out_shape=jax.ShapeDtypeStruct((1, 1), jnp.float32),
            grid=grid,
            in_specs=[in_spec, in_spec, in_spec, in_spec],
            out_specs=pl.BlockSpec((1, 1), lambda g: (0, 0),
                                   memory_space=pltpu.VMEM),
            compiler_params=pltpu.CompilerParams(
                dimension_semantics=("arbitrary",)),
        )(xa, xb, ta, tb)
        return out[0, 0]
    elif reduction == "none":
        out = pl.pallas_call(
            functools.partial(_ranker_none_kernel, margin=margin),
            out_shape=jax.ShapeDtypeStruct((rows, _LANE), jnp.float32),
            grid=grid,
            in_specs=[in_spec, in_spec, in_spec, in_spec],
            out_specs=in_spec,
            compiler_params=pltpu.CompilerParams(
                dimension_semantics=("parallel",)),
        )(xa, xb, ta, tb)
        return out.reshape(-1)[:h]
    else:
        raise NotImplementedError(reduction)


# ---------------------------------------------------------------------------
# Pure-JAX reference (mirrors the PyTorch forward exactly)
# ---------------------------------------------------------------------------
def ranker_loss_ref(inputs, targets, *, margin=1.0, reduction="mean"):
    n = inputs.shape[0]
    if n % 2 != 0 and n > 2:
        inputs = inputs[:-1]
        targets = targets[:-1]
        n -= 1
    h = n // 2
    d = (inputs - jnp.flip(inputs, 0))[:h]
    td = (targets - jnp.flip(targets, 0))[:h]
    one = 2.0 * jnp.sign(jnp.maximum(td, 0.0)) - 1.0
    s = jax.nn.sigmoid(d)
    if reduction == "mean":
        return -jnp.sum(one * jnp.log(s) + (1.0 - one) * jnp.log(1.0 - s)) / h
    return jnp.maximum(margin - one * s, 0.0)


if __name__ == "__main__":
    key = jax.random.PRNGKey(0)
    k1, k2 = jax.random.split(key)
    B = 8  # even batch of ranking scores
    inputs = jax.random.normal(k1, (B,), dtype=jnp.float32)
    targets = jax.random.normal(k2, (B,), dtype=jnp.float32)

    # reduction='mean' (module default)
    loss_mean = jax.block_until_ready(
        ranker_loss(inputs, targets, margin=1.0, reduction="mean"))
    ref_mean = ranker_loss_ref(inputs, targets, margin=1.0, reduction="mean")
    assert jnp.allclose(loss_mean, ref_mean, rtol=1e-5, atol=1e-5), (
        loss_mean, ref_mean)

    # reduction='none'
    loss_none = jax.block_until_ready(
        ranker_loss(inputs, targets, margin=1.0, reduction="none"))
    ref_none = ranker_loss_ref(inputs, targets, margin=1.0, reduction="none")
    assert jnp.allclose(loss_none, ref_none, rtol=1e-5, atol=1e-5)

    # odd batch (> 2): module trims the last element
    B2 = 9
    inputs2 = jax.random.normal(k2, (B2,), dtype=jnp.float32)
    targets2 = jax.random.normal(k1, (B2,), dtype=jnp.float32)
    loss_odd = jax.block_until_ready(
        ranker_loss(inputs2, targets2, margin=1.0, reduction="mean"))
    ref_odd = ranker_loss_ref(inputs2, targets2, margin=1.0, reduction="mean")
    assert jnp.allclose(loss_odd, ref_odd, rtol=1e-5, atol=1e-5)

    print("KERNEL_OK")
</pallas_src>

<mosaic_0001>
module attributes {stable_mosaic.version = 11 : i64} {
  func.func @_ranker_mean_kernel(%arg0: i32, %arg1: memref<8x128xf32, #tpu.memory_space<vmem>>, %arg2: memref<8x128xf32, #tpu.memory_space<vmem>>, %arg3: memref<8x128xf32, #tpu.memory_space<vmem>>, %arg4: memref<8x128xf32, #tpu.memory_space<vmem>>, %arg5: memref<1x1xf32, #tpu.memory_space<vmem>>) attributes {dimension_semantics = [#tpu.dimension_semantics<arbitrary>], iteration_bounds = array<i64: 1>, scalar_prefetch = 0 : i64, scratch_operands = 0 : i64, tpu.core_type = #tpu.core_type<tc>, window_params = [{transform_indices = @transform_0, window_bounds = array<i64: 8, 128>}, {transform_indices = @transform_1, window_bounds = array<i64: 8, 128>}, {transform_indices = @transform_2, window_bounds = array<i64: 8, 128>}, {transform_indices = @transform_3, window_bounds = array<i64: 8, 128>}, {pipeline_mode = #tpu.pipeline_mode<synchronous>, transform_indices = @transform_4, window_bounds = array<i64: 1, 1>}]} {
    %c0_i32 = arith.constant 0 : i32
    %0 = arith.cmpi eq, %arg0, %c0_i32 : i32
    %1 = arith.extui %0 : i1 to i32
    %c0_i32_0 = arith.constant 0 : i32
    %2 = arith.cmpi ne, %1, %c0_i32_0 : i32
    scf.if %2 {
      %cst_21 = arith.constant 0.000000e+00 : f32
      %49 = vector.broadcast %cst_21 : f32 to vector<1x1xf32>
      %c0_22 = arith.constant 0 : index
      %c0_23 = arith.constant 0 : index
      %50 = vector.load %arg5[%c0_22, %c0_23] : memref<1x1xf32, #tpu.memory_space<vmem>>, vector<1x1xf32>
      tpu.vector_store %arg5[%c0_22, %c0_23], %49 {strides = array<i32>} : memref<1x1xf32, #tpu.memory_space<vmem>>, vector<1x1xf32>,
    } else {
    }
    %c0 = arith.constant 0 : index
    %c0_1 = arith.constant 0 : index
    %3 = vector.load %arg1[%c0, %c0_1] : memref<8x128xf32, #tpu.memory_space<vmem>>, vector<8x128xf32>
    %c0_2 = arith.constant 0 : index
    %c0_3 = arith.constant 0 : index
    %4 = vector.load %arg2[%c0_2, %c0_3] : memref<8x128xf32, #tpu.memory_space<vmem>>, vector<8x128xf32>
    %5 = arith.subf %3, %4 : vector<8x128xf32>
    %c0_4 = arith.constant 0 : index
    %c0_5 = arith.constant 0 : index
    %6 = vector.load %arg3[%c0_4, %c0_5] : memref<8x128xf32, #tpu.memory_space<vmem>>, vector<8x128xf32>
    %c0_6 = arith.constant 0 : index
    %c0_7 = arith.constant 0 : index
    %7 = vector.load %arg4[%c0_6, %c0_7] : memref<8x128xf32, #tpu.memory_space<vmem>>, vector<8x128xf32>
    %8 = arith.subf %6, %7 : vector<8x128xf32>
    %cst = arith.constant 0.000000e+00 : f32
    %9 = vector.broadcast %cst : f32 to vector<8x128xf32>
    %10 = arith.cmpf ogt, %8, %9 : vector<8x128xf32>
    %cst_8 = arith.constant 1.000000e+00 : f32
    %cst_9 = arith.constant -1.000000e+00 : f32
    %11 = vector.broadcast %cst_8 : f32 to vector<8x128xf32>
    %12 = vector.broadcast %cst_9 : f32 to vector<8x128xf32>
    %13 = arith.select %10, %11, %12 : vector<8x128xi1>, vector<8x128xf32>
    %cst_10 = arith.constant 0.000000e+00 : f32
    %14 = vector.broadcast %cst_10 : f32 to vector<8x128xf32>
    %15 = arith.maximumf %5, %14 : vector<8x128xf32>
    %16 = math.absf %5 : vector<8x128xf32>
    %cst_11 = arith.constant 0.000000e+00 : f32
    %17 = vector.broadcast %cst_11 : f32 to vector<8x128xf32>
    %18 = arith.subf %17, %16 : vector<8x128xf32>
    %19 = math.exp %18 : vector<8x128xf32>
    %cst_12 = arith.constant 1.000000e+00 : f32
    %20 = vector.broadcast %cst_12 : f32 to vector<8x128xf32>
    %21 = arith.addf %20, %19 : vector<8x128xf32>
    %22 = math.log %21 : vector<8x128xf32>
    %23 = arith.addf %15, %22 : vector<8x128xf32>
    %24 = arith.mulf %13, %5 : vector<8x128xf32>
    %25 = arith.subf %24, %23 : vector<8x128xf32>
    %26 = tpu.iota {dimensions = array<i32: 0>} : vector<8x128xi32>
    %27 = tpu.iota {dimensions = array<i32: 1>} : vector<8x128xi32>
    %c8_i32 = arith.constant 8 : i32
    %28 = arith.muli %arg0, %c8_i32 : i32
    %29 = vector.broadcast %28 : i32 to vector<8x128xi32>
    %30 = arith.addi %29, %26 : vector<8x128xi32>
    %c128_i32 = arith.constant 128 : i32
    %31 = vector.broadcast %c128_i32 : i32 to vector<8x128xi32>
    %32 = arith.muli %30, %31 : vector<8x128xi32>
    %33 = arith.addi %32, %27 : vector<8x128xi32>
    %c4_i32 = arith.constant 4 : i32
    %34 = vector.broadcast %c4_i32 : i32 to vector<8x128xi32>
    %35 = arith.cmpi slt, %33, %34 : vector<8x128xi32>
    %cst_13 = arith.constant 0.000000e+00 : f32
    %36 = vector.broadcast %cst_13 : f32 to vector<8x128xf32>
    %37 = arith.select %35, %25, %36 : vector<8x128xi1>, vector<8x128xf32>
    %c0_14 = arith.constant 0 : index
    %c0_15 = arith.constant 0 : index
    %38 = vector.load %arg5[%c0_14, %c0_15] : memref<1x1xf32, #tpu.memory_space<vmem>>, vector<1x1xf32>
    %39 = vector.shape_cast %37 : vector<8x128xf32> to vector<1x8x128xf32>
    %cst_16 = arith.constant dense<0.000000e+00> : vector<1xf32>
    %40 = vector.multi_reduction <add>, %39, %cst_16 [1, 2] : vector<1x8x128xf32> to vector<1xf32>
    %41 = vector.shape_cast %40 : vector<1xf32> to vector<1x1x1xf32>
    %42 = vector.extract %41[0, 0, 0] : f32 from vector<1x1x1xf32>
    %43 = vector.broadcast %42 : f32 to vector<1x1xf32>
    %44 = arith.addf %38, %43 : vector<1x1xf32>
    %c0_17 = arith.constant 0 : index
    %c0_18 = arith.constant 0 : index
    %45 = vector.load %arg5[%c0_17, %c0_18] : memref<1x1xf32, #tpu.memory_space<vmem>>, vector<1x1xf32>
    tpu.vector_store %arg5[%c0_17, %c0_18], %44 {strides = array<i32>} : memref<1x1xf32, #tpu.memory_space<vmem>>, vector<1x1xf32>,
    %c0_i32_19 = arith.constant 0 : i32
    %46 = arith.cmpi eq, %arg0, %c0_i32_19 : i32
    %47 = arith.extui %46 : i1 to i32
    %c0_i32_20 = arith.constant 0 : i32
    %48 = arith.cmpi ne, %47, %c0_i32_20 : i32
    scf.if %48 {
      %c0_21 = arith.constant 0 : index
      %c0_22 = arith.constant 0 : index
      %49 = vector.load %arg5[%c0_21, %c0_22] : memref<1x1xf32, #tpu.memory_space<vmem>>, vector<1x1xf32>
      %cst_23 = arith.constant -2.500000e-01 : f32
      %50 = vector.broadcast %cst_23 : f32 to vector<1x1xf32>
      %51 = arith.mulf %49, %50 : vector<1x1xf32>
      %c0_24 = arith.constant 0 : index
      %c0_25 = arith.constant 0 : index
      %52 = vector.load %arg5[%c0_24, %c0_25] : memref<1x1xf32, #tpu.memory_space<vmem>>, vector<1x1xf32>
      tpu.vector_store %arg5[%c0_24, %c0_25], %51 {strides = array<i32>} : memref<1x1xf32, #tpu.memory_space<vmem>>, vector<1x1xf32>,
    } else {
    }
    return
  }
  func.func @transform_0(%arg0: i32) -> (i32, i32) {
    %c0_i32 = arith.constant 0 : i32
    %c0_i32_0 = arith.constant 0 : i32
    return %arg0, %c0_i32 : i32, i32
  }
  func.func @transform_1(%arg0: i32) -> (i32, i32) {
    %c0_i32 = arith.constant 0 : i32
    %c0_i32_0 = arith.constant 0 : i32
    return %arg0, %c0_i32 : i32, i32
  }
  func.func @transform_2(%arg0: i32) -> (i32, i32) {
    %c0_i32 = arith.constant 0 : i32
    %c0_i32_0 = arith.constant 0 : i32
    return %arg0, %c0_i32 : i32, i32
  }
  func.func @transform_3(%arg0: i32) -> (i32, i32) {
    %c0_i32 = arith.constant 0 : i32
    %c0_i32_0 = arith.constant 0 : i32
    return %arg0, %c0_i32 : i32, i32
  }
  func.func @transform_4(%arg0: i32) -> (i32, i32) {
    %c0_i32 = arith.constant 0 : i32
    %c0_i32_0 = arith.constant 0 : i32
    %c0_i32_1 = arith.constant 0 : i32
    return %c0_i32, %c0_i32_0 : i32, i32
  }
}

</mosaic_0001>

<llo_original>
// kernel: tpu_custom_call.1
$region0: #{tpu_custom_call.1}
  #allocation0 [shape = 'u32[]', space=smem, size = 0x4, offset = 0x4, fixed_abs, tag = 'smem constant byte address 0x4 - core index']
  #allocation1 [shape = 'u32[72,128]{1,0:T(1,128)}', space=vmem, size = 0x9000, scoped, tag = 'internal scratch']
  %s0 = inlined_call_operand.hbm [shape: f32[8,128], index: 0, kind: input, shape index: {}]
  %s1 = inlined_call_operand.hbm [shape: f32[8,128], index: 1, kind: input, shape index: {}]
  %s2 = inlined_call_operand.hbm [shape: f32[8,128], index: 2, kind: input, shape index: {}]
  %s3 = inlined_call_operand.hbm [shape: f32[8,128], index: 3, kind: input, shape index: {}]
  %s4 = inlined_call_operand.hbm [shape: f32[1,1], index: 4, kind: output, shape index: {}]
  %s5 = sld [smem:[#allocation0]]
  $region50: #{tpu_custom_call.1} parent=0
    _
  %s7 = ssub.s32 1, %s5
  %s8 = scalar_select 0, %s7, %s5
  $region1: #{tpu_custom_call.1} parent=0
    #allocation2 [shape = 'u8[4096]{0}', space=vmem, size = 0x1000, scoped, tag = 'input window, operand 0, single buffered']
    #allocation3 [shape = 's32[1]{0}', space=sflag, size = 0x4, scoped, tag = 'scoped memory for tpu_custom_call.1']
    #allocation4 [shape = 's32[1]{0}', space=sflag, size = 0x4, scoped, tag = 'scoped memory for tpu_custom_call.1']
    #allocation5 [shape = 'u8[4096]{0}', space=vmem, size = 0x1000, scoped, tag = 'input window, operand 1, single buffered']
    #allocation6 [shape = 's32[1]{0}', space=sflag, size = 0x4, scoped, tag = 'scoped memory for tpu_custom_call.1']
    #allocation7 [shape = 'u8[4096]{0}', space=vmem, size = 0x1000, scoped, tag = 'input window, operand 2, single buffered']
    #allocation8 [shape = 'u8[4096]{0}', space=vmem, size = 0x1000, scoped, tag = 'input window, operand 3, single buffered']
    #allocation9 [shape = 's32[1]{0}', space=sflag, size = 0x4, scoped, tag = 'scoped memory for tpu_custom_call.1']
    #allocation10 [shape = 'u8[512]{0}', space=vmem, size = 0x400, scoped, tag = 'output window, operand 0, single buffered']
    %9 = vsyncpa [#allocation3], 0
    %10 = vsyncpa [#allocation6], 0
    %11 = vsyncpa [#allocation9], 0
    %12 = vsyncpa [#allocation4], 0
    // Predicated region
    $region2: #{tpu_custom_call.1} parent=1 // pred_check
      _
    $region3: #{tpu_custom_call.1} parent=1 // pred_check_branch
      %14 = sbr.rel (0) target = $region5
    $region4: #{tpu_custom_call.1} parent=1 // pred_region
      %16 = vsyncadd [#allocation3], 0
      %s18 = sshll.u32 %s0, 4
      %s19 = int_to_ptr.hbm [resolvable:$true] %s18
      %s20 = sshll.u32 [#allocation2], 4
      %s21 = int_to_ptr.vmem [resolvable:$true] %s20
      %23 = dma.hbm_to_vmem [thread:$0]  %s19, 128, %s21, [#allocation3]
    $region5: #{tpu_custom_call.1} parent=1 // pred_fallthru
      _
    // Predicated region
    $region6: #{tpu_custom_call.1} parent=1 // pred_check
      _
    $region7: #{tpu_custom_call.1} parent=1 // pred_check_branch
      %25 = sbr.rel (0) target = $region9
    $region8: #{tpu_custom_call.1} parent=1 // pred_region
      %27 = vsyncadd [#allocation6], 0
      %s29 = sshll.u32 %s1, 4
      %s30 = int_to_ptr.hbm [resolvable:$true] %s29
      %s31 = sshll.u32 [#allocation5], 4
      %s32 = int_to_ptr.vmem [resolvable:$true] %s31
      %34 = dma.hbm_to_vmem [thread:$0]  %s30, 128, %s32, [#allocation6]
    $region9: #{tpu_custom_call.1} parent=1 // pred_fallthru
      _
    // Predicated region
    $region10: #{tpu_custom_call.1} parent=1 // pred_check
      _
    $region11: #{tpu_custom_call.1} parent=1 // pred_check_branch
      %36 = sbr.rel (0) target = $region13
    $region12: #{tpu_custom_call.1} parent=1 // pred_region
      %38 = vsyncadd [#allocation6], 0
      %s40 = sshll.u32 %s2, 4
      %s41 = int_to_ptr.hbm [resolvable:$true] %s40
      %s42 = sshll.u32 [#allocation7], 4
      %s43 = int_to_ptr.vmem [resolvable:$true] %s42
      %45 = dma.hbm_to_vmem [thread:$0]  %s41, 128, %s43, [#allocation6]
    $region13: #{tpu_custom_call.1} parent=1 // pred_fallthru
      _
    // Predicated region
    $region14: #{tpu_custom_call.1} parent=1 // pred_check
      _
    $region15: #{tpu_custom_call.1} parent=1 // pred_check_branch
      %47 = sbr.rel (0) target = $region17
    $region16: #{tpu_custom_call.1} parent=1 // pred_region
      %49 = vsyncadd [#allocation9], 0
      %s51 = sshll.u32 %s3, 4
      %s52 = int_to_ptr.hbm [resolvable:$true] %s51
      %s53 = sshll.u32 [#allocation8], 4
      %s54 = int_to_ptr.vmem [resolvable:$true] %s53
      %56 = dma.hbm_to_vmem [thread:$0]  %s52, 128, %s54, [#allocation9]
    $region17: #{tpu_custom_call.1} parent=1 // pred_fallthru
      _
    // Predicated region
    $region18: #{tpu_custom_call.1} parent=1 // pred_check
      _
    $region19: #{tpu_custom_call.1} parent=1 // pred_check_branch
      %58 = sbr.rel (0) target = $region21
    $region20: #{tpu_custom_call.1} parent=1 // pred_region
      %60 = dma.done [#allocation3], 128
    $region21: #{tpu_custom_call.1} parent=1 // pred_fallthru
      _
    // Predicated region
    $region22: #{tpu_custom_call.1} parent=1 // pred_check
      _
    $region23: #{tpu_custom_call.1} parent=1 // pred_check_branch
      %62 = sbr.rel (0) target = $region25
    $region24: #{tpu_custom_call.1} parent=1 // pred_region
      %64 = dma.done [#allocation6], 128
    $region25: #{tpu_custom_call.1} parent=1 // pred_fallthru
      _
    // Predicated region
    $region26: #{tpu_custom_call.1} parent=1 // pred_check
      _
    $region27: #{tpu_custom_call.1} parent=1 // pred_check_branch
      %66 = sbr.rel (0) target = $region29
    $region28: #{tpu_custom_call.1} parent=1 // pred_region
      %68 = dma.done [#allocation6], 128
    $region29: #{tpu_custom_call.1} parent=1 // pred_fallthru
      _
    // Predicated region
    $region30: #{tpu_custom_call.1} parent=1 // pred_check
      _
    $region31: #{tpu_custom_call.1} parent=1 // pred_check_branch
      %70 = sbr.rel (0) target = $region33
    $region32: #{tpu_custom_call.1} parent=1 // pred_region
      %72 = dma.done [#allocation9], 128
    $region33: #{tpu_custom_call.1} parent=1 // pred_fallthru
      _
    %p73 = scmp.eq.s32.totalorder 0, 0
    // Predicated region
    $region34: #{tpu_custom_call.1} parent=1 // pred_check
      %p74 = pneg %p73
    $region35: #{tpu_custom_call.1} parent=1 // pred_check_branch
      %76 = sbr.rel (%p74) target = $region37
    $region36: #{tpu_custom_call.1} parent=1 // pred_region
      %vm77 = vcmask 0
      %78 = vst.msk [vmem:[#allocation10] sm:$0x1] %vm77, 0.0
    $region37: #{tpu_custom_call.1} parent=1 // pred_fallthru
      _
    %v79 = vld [vmem:[#allocation2] sm:$0xff]
    %v80 = vld [vmem:[#allocation5] sm:$0xff]
    %v81 = vsub.f32 %v79, %v80
    %v82 = vld [vmem:[#allocation7] sm:$0xff]
    %v83 = vld [vmem:[#allocation8] sm:$0xff]
    %v84 = vsub.f32 %v82, %v83
    %vm85 = vcmp.gt.f32.partialorder %v84, 0.0
    %v86 = vsel %vm85, 1.0, -1.0
    %v87 = vmax.f32 %v81, 0.0
    %v88 = vand.u32 2147483647, %v81
    %v89 = vsub.f32 0.0, %v88
    %v90 = vmul.f32 %v89, 1.442695
    %v91 = vpow.pop %v90
    %v92 = vadd.f32 %v91, 1.0
    %v93 = vlog2.pop %v92
    %v94 = vmul.f32 %v93, 0.6931472
    %v95 = vadd.f32 %v87, %v94
    %v96 = vmul.f32 %v86, %v81
    %v97 = vsub.f32 %v96, %v95
    %v98 = vlaneseq
    %v99 = vshrl.u32 %v98, 7
    %v100 = vlaneseq
    %v101 = vand.u32 %v100, 127
    %s102 = smul.u32 0, 8
    %v103 = vstv %s102
    %v104 = vadd.s32 %v103, %v99
    %v105 = vmul.u32 %v104, 128
    %v106 = vadd.s32 %v105, %v101
    %vm107 = vcmp.lt.s32.totalorder %v106, 4
    %v108 = vsel %vm107, %v97, 0.0
    %v109 = vld [vmem:[#allocation10] sm:$0x1]
    %110 = vadd.xlane.f32.xlu0 %v108
    %v111 = vpop.xlane.xlu0 %110
    %v112 = vrot.slane %v111, 4
    %v113 = vadd.f32 %v111, %v112
    %v114 = vrot.slane %v113, 2
    %v115 = vadd.f32 %v113, %v114
    %v116 = vrot.slane %v115, 1
    %v117 = vadd.f32 %v115, %v116
    %s118 = vtos %v117
    %v119 = vstv %s118
    %v120 = vadd.f32 %v109, %v119
    %vm121 = vcmask 0
    %122 = vst.msk [vmem:[#allocation10] sm:$0x1] %vm121, %v120
    // Predicated region
    $region38: #{tpu_custom_call.1} parent=1 // pred_check
      %p123 = pneg %p73
    $region39: #{tpu_custom_call.1} parent=1 // pred_check_branch
      %125 = sbr.rel (%p123) target = $region41
    $region40: #{tpu_custom_call.1} parent=1 // pred_region
      %v126 = vld [vmem:[#allocation10] sm:$0x1]
      %v127 = vmul.f32 %v126, -0.25
      %128 = vst.msk [vmem:[#allocation10] sm:$0x1] %vm121, %v127
    $region41: #{tpu_custom_call.1} parent=1 // pred_fallthru
      _
    // Predicated region
    $region42: #{tpu_custom_call.1} parent=1 // pred_check
      _
    $region43: #{tpu_custom_call.1} parent=1 // pred_check_branch
      %130 = sbr.rel (0) target = $region45
    $region44: #{tpu_custom_call.1} parent=1 // pred_region
      %132 = vsyncadd [#allocation4], 0
      %s134 = sshll.u32 [#allocation10], 4
      %s135 = int_to_ptr.vmem [resolvable:$true] %s134
      %s136 = sshll.u32 %s4, 4
      %s137 = int_to_ptr.hbm [resolvable:$true] %s136
      %139 = dma.vmem_to_hbm [thread:$0]  %s135, 16, %s137, [#allocation4]
    $region45: #{tpu_custom_call.1} parent=1 // pred_fallthru
      _
    // Predicated region
    $region46: #{tpu_custom_call.1} parent=1 // pred_check
      _
    $region47: #{tpu_custom_call.1} parent=1 // pred_check_branch
      %141 = sbr.rel (0) target = $region49
    $region48: #{tpu_custom_call.1} parent=1 // pred_region
      %143 = dma.done [#allocation4], 16
    $region49: #{tpu_custom_call.1} parent=1 // pred_fallthru
      _
    %144 = vsyncpa [#allocation3], 1
    %145 = vsyncpa [#allocation6], 1
    %146 = vsyncpa [#allocation9], 1
    %147 = vsyncpa [#allocation4], 1

</llo_original>
